<compile_context>
chip_gen: v5e
topology: v5e:2x2
jax: 0.10.0
libtpu: 0.0.40
codegen_flags: <defaults>
</compile_context>

<pallas_src>
import functools

import jax
import jax.numpy as jnp
from jax import lax
from jax.experimental import pallas as pl
from jax.experimental.pallas import tpu as pltpu


def _lr_kernel(x1_ref, x2_ref, w1_ref, w2_ref, b_ref, out_ref, *, compute_dtype):
    # x1_ref: (TB, d1)   first input stream
    # x2_ref: (TB, d2)   demographic input stream
    # w1_ref: (O,  d1)   weight slice (PyTorch layout, no transpose)
    # w2_ref: (O,  d2)   weight slice
    # b_ref:  (1,  O)    bias (f32)
    # out_ref:(TB, 2*O)  packed output: [:, :O] = linear, [:, O:] = sigmoid
    x1 = x1_ref[...]
    x2 = x2_ref[...]
    w1 = w1_ref[...]
    w2 = w2_ref[...]
    if compute_dtype is not None:
        # Optional in-kernel cast (avoid on v5e: no bf16 VPU, pure overhead).
        x1 = x1.astype(compute_dtype)
        x2 = x2.astype(compute_dtype)
        w1 = w1.astype(compute_dtype)
        w2 = w2.astype(compute_dtype)

    # Contract x dim 1 with weight dim 1 -> (TB, O); fuses the concat as two
    # accumulated MXU dots and avoids any transposed weight copy.
    dn = (((1,), (1,)), ((), ()))
    lin = lax.dot_general(x1, w1, dn, preferred_element_type=jnp.float32)
    lin = lin + lax.dot_general(x2, w2, dn, preferred_element_type=jnp.float32)
    lin = lin + b_ref[...]  # f32 bias add on the VPU

    # Exact sigmoid (exp + divide -> EUP slot; effectively free filler).
    sig = 1.0 / (1.0 + jnp.exp(-lin))

    # Single packed store: one output DMA stream instead of two 4-wide ones.
    out_ref[...] = jnp.concatenate([lin, sig], axis=-1).astype(out_ref.dtype)


def _round_up(x, m):
    return ((x + m - 1) // m) * m


def lr_model_forward(inputs, inputs_demoips, weight, bias, *,
                     compute_dtype=None, block_b=8192,
                     vmem_limit_bytes=64 * 1024 * 1024):
    """Pallas implementation of LRmodel.forward.

    inputs:          (B, d1)              f32 or bf16
    inputs_demoips:  (B, d2)              f32 or bf16
    weight:          (output_dim, d1+d2)  f32 or bf16 (PyTorch nn.Linear layout)
    bias:            (output_dim,)        f32
    compute_dtype:   None (default) contracts the operands in their stored
                     dtype (recommended: feed bf16 from HBM on v6e/v7x).
                     Setting it forces an in-kernel cast (skip on v5e).
    block_b:         batch rows per grid step; primary perf sweep knob.
                     Keep <= ~8-12k on v7x (64 MiB VMEM), ~16-24k on v5e/v6e.
    returns (sigmoid(linear), linear), each (B, output_dim) float32.
    """
    B, d1 = inputs.shape
    d2 = inputs_demoips.shape[1]
    O = weight.shape[0]

    # Parameter glue (done once, tiny): split the weight along its input dim
    # so the activation concat never has to be materialized.
    w1 = weight[:, :d1]                           # (O, d1)
    w2 = weight[:, d1:]                           # (O, d2)
    b2d = bias.astype(jnp.float32).reshape(1, O)  # keep 2-D for TPU layout

    # Batch tiling. Ragged last blocks are handled by Pallas (masked writes),
    # so there is no wrapper-side pad / slice. When the whole batch fits one
    # block but B >= 16, split into >=2 steps so both v7x TensorCores get work.
    if B > block_b:
        tb = block_b
    elif B >= 16:
        tb = min(block_b, _round_up(pl.cdiv(B, 2), 8))
    else:
        tb = B
    nb = pl.cdiv(B, tb)

    kernel = functools.partial(_lr_kernel, compute_dtype=compute_dtype)

    packed = pl.pallas_call(
        kernel,
        out_shape=jax.ShapeDtypeStruct((B, 2 * O), jnp.float32),
        grid=(nb,),
        in_specs=[
            pl.BlockSpec((tb, d1), lambda i: (i, 0)),   # x1 tile, pipelined
            pl.BlockSpec((tb, d2), lambda i: (i, 0)),   # x2 tile, pipelined
            pl.BlockSpec((O, d1), lambda i: (0, 0)),    # weight: VMEM-resident
            pl.BlockSpec((O, d2), lambda i: (0, 0)),    # weight: VMEM-resident
            pl.BlockSpec((1, O), lambda i: (0, 0)),     # bias:   VMEM-resident
        ],
        out_specs=pl.BlockSpec((tb, 2 * O), lambda i: (i, 0)),
        compiler_params=pltpu.CompilerParams(
            dimension_semantics=("parallel",),          # megacore on v7x
            vmem_limit_bytes=vmem_limit_bytes,          # allow big batch tiles
        ),
    )(inputs, inputs_demoips, w1, w2, b2d)

    lin = packed[:, :O]
    sig = packed[:, O:]
    return sig, lin


if __name__ == "__main__":
    # Small shapes consistent with the module: batch=8, inputs dim=24,
    # demographic dim=8 -> input_dim=32, output_dim=4.
    B, d1, d2, output_dim = 8, 24, 8, 4
    input_dim = d1 + d2
    initrange = 0.1

    key = jax.random.PRNGKey(0)
    k_x, k_demo, k_w, k_b = jax.random.split(key, 4)

    inputs = jax.random.normal(k_x, (B, d1), dtype=jnp.float32)
    inputs_demoips = jax.random.normal(k_demo, (B, d2), dtype=jnp.float32)

    # Deterministic parameter init mirroring param.data.uniform_(-initrange, initrange)
    weight = jax.random.uniform(
        k_w, (output_dim, input_dim), dtype=jnp.float32,
        minval=-initrange, maxval=initrange)
    bias = jax.random.uniform(
        k_b, (output_dim,), dtype=jnp.float32,
        minval=-initrange, maxval=initrange)

    # Reference in plain JAX (matches the PyTorch f32 forward).
    x_ref = jnp.concatenate([inputs, inputs_demoips], axis=1)
    lin_ref = x_ref @ weight.T + bias
    sig_ref = jax.nn.sigmoid(lin_ref)

    # f32, single-block path.
    sig, lin = lr_model_forward(inputs, inputs_demoips, weight, bias)
    jax.block_until_ready((sig, lin))
    assert jnp.allclose(lin, lin_ref, atol=1e-4), "linear mismatch (f32)"
    assert jnp.allclose(sig, sig_ref, atol=1e-4), "sigmoid mismatch (f32)"

    # Ragged multi-block path (no wrapper pad / slice): B=40 with a forced
    # small tile -> 3 grid steps, last one partial.
    B2 = 40
    k_x2, k_d2 = jax.random.split(jax.random.PRNGKey(1))
    inputs2 = jax.random.normal(k_x2, (B2, d1), dtype=jnp.float32)
    demo2 = jax.random.normal(k_d2, (B2, d2), dtype=jnp.float32)
    lin_ref2 = jnp.concatenate([inputs2, demo2], axis=1) @ weight.T + bias
    sig_ref2 = jax.nn.sigmoid(lin_ref2)
    sig2, lin2 = lr_model_forward(inputs2, demo2, weight, bias, block_b=16)
    jax.block_until_ready((sig2, lin2))
    assert jnp.allclose(lin2, lin_ref2, atol=1e-4), "linear mismatch (ragged)"
    assert jnp.allclose(sig2, sig_ref2, atol=1e-4), "sigmoid mismatch (ragged)"

    # bf16-ingestion path (v6e/v7x): operands arrive bf16 from HBM, f32 accum.
    sig_bf, lin_bf = lr_model_forward(
        inputs.astype(jnp.bfloat16), inputs_demoips.astype(jnp.bfloat16),
        weight.astype(jnp.bfloat16), bias)
    jax.block_until_ready((sig_bf, lin_bf))
    assert jnp.allclose(lin_bf, lin_ref, atol=3e-2), "linear mismatch (bf16)"
    assert jnp.allclose(sig_bf, sig_ref, atol=3e-2), "sigmoid mismatch (bf16)"

    print("KERNEL_OK")
</pallas_src>

<mosaic_0001>
module attributes {stable_mosaic.version = 11 : i64} {
  func.func @_lr_kernel(%arg0: i32, %arg1: memref<8x24xf32, #tpu.memory_space<vmem>>, %arg2: memref<8x8xf32, #tpu.memory_space<vmem>>, %arg3: memref<4x24xf32, #tpu.memory_space<vmem>>, %arg4: memref<4x8xf32, #tpu.memory_space<vmem>>, %arg5: memref<1x4xf32, #tpu.memory_space<vmem>>, %arg6: memref<8x8xf32, #tpu.memory_space<vmem>>) attributes {dimension_semantics = [#tpu.dimension_semantics<parallel>], iteration_bounds = array<i64: 1>, scalar_prefetch = 0 : i64, scratch_operands = 0 : i64, tpu.core_type = #tpu.core_type<tc>, window_params = [{transform_indices = @transform_0, window_bounds = array<i64: 8, 24>}, {transform_indices = @transform_1, window_bounds = array<i64: 8, 8>}, {pipeline_mode = #tpu.pipeline_mode<synchronous>, transform_indices = @transform_2, window_bounds = array<i64: 4, 24>}, {pipeline_mode = #tpu.pipeline_mode<synchronous>, transform_indices = @transform_3, window_bounds = array<i64: 4, 8>}, {pipeline_mode = #tpu.pipeline_mode<synchronous>, transform_indices = @transform_4, window_bounds = array<i64: 1, 4>}, {transform_indices = @transform_5, window_bounds = array<i64: 8, 8>}]} {
    %c0 = arith.constant 0 : index
    %c0_0 = arith.constant 0 : index
    %0 = vector.load %arg1[%c0, %c0_0] : memref<8x24xf32, #tpu.memory_space<vmem>>, vector<8x24xf32>
    %c0_1 = arith.constant 0 : index
    %c0_2 = arith.constant 0 : index
    %1 = vector.load %arg2[%c0_1, %c0_2] : memref<8x8xf32, #tpu.memory_space<vmem>>, vector<8x8xf32>
    %c0_3 = arith.constant 0 : index
    %c0_4 = arith.constant 0 : index
    %2 = vector.load %arg3[%c0_3, %c0_4] : memref<4x24xf32, #tpu.memory_space<vmem>>, vector<4x24xf32>
    %c0_5 = arith.constant 0 : index
    %c0_6 = arith.constant 0 : index
    %3 = vector.load %arg4[%c0_5, %c0_6] : memref<4x8xf32, #tpu.memory_space<vmem>>, vector<4x8xf32>
    %cst = arith.constant dense<0.000000e+00> : vector<8x4xf32>
    %4 = tpu.matmul %0, %2, %cst {dimension_numbers = #tpu.dot_dimension_numbers<[1], [1], [0], [0], [0, 0, 1, 0], [], []>} : vector<8x24xf32>, vector<4x24xf32>, vector<8x4xf32> -> vector<8x4xf32>
    %cst_7 = arith.constant dense<0.000000e+00> : vector<8x4xf32>
    %5 = tpu.matmul %1, %3, %cst_7 {dimension_numbers = #tpu.dot_dimension_numbers<[1], [1], [0], [0], [0, 0, 1, 0], [], []>} : vector<8x8xf32>, vector<4x8xf32>, vector<8x4xf32> -> vector<8x4xf32>
    %6 = arith.addf %4, %5 : vector<8x4xf32>
    %c0_8 = arith.constant 0 : index
    %c0_9 = arith.constant 0 : index
    %7 = vector.load %arg5[%c0_8, %c0_9] : memref<1x4xf32, #tpu.memory_space<vmem>>, vector<1x4xf32>
    %8 = vector.broadcast %7 : vector<1x4xf32> to vector<8x4xf32>
    %9 = arith.addf %6, %8 : vector<8x4xf32>
    %cst_10 = arith.constant 0.000000e+00 : f32
    %10 = vector.broadcast %cst_10 : f32 to vector<8x4xf32>
    %11 = arith.subf %10, %9 : vector<8x4xf32>
    %12 = math.exp %11 : vector<8x4xf32>
    %cst_11 = arith.constant 1.000000e+00 : f32
    %13 = vector.broadcast %cst_11 : f32 to vector<8x4xf32>
    %14 = arith.addf %13, %12 : vector<8x4xf32>
    %cst_12 = arith.constant 1.000000e+00 : f32
    %15 = vector.broadcast %cst_12 : f32 to vector<8x4xf32>
    %16 = arith.divf %15, %14 : vector<8x4xf32>
    %17 = tpu.concatenate %9, %16 in 1 : vector<8x4xf32>, vector<8x4xf32> -> vector<8x8xf32>
    %c0_13 = arith.constant 0 : index
    %c0_14 = arith.constant 0 : index
    %18 = vector.load %arg6[%c0_13, %c0_14] : memref<8x8xf32, #tpu.memory_space<vmem>>, vector<8x8xf32>
    tpu.vector_store %arg6[%c0_13, %c0_14], %17 {strides = array<i32>} : memref<8x8xf32, #tpu.memory_space<vmem>>, vector<8x8xf32>,
    return
  }
  func.func @transform_0(%arg0: i32) -> (i32, i32) {
    %c0_i32 = arith.constant 0 : i32
    %c0_i32_0 = arith.constant 0 : i32
    return %arg0, %c0_i32 : i32, i32
  }
  func.func @transform_1(%arg0: i32) -> (i32, i32) {
    %c0_i32 = arith.constant 0 : i32
    %c0_i32_0 = arith.constant 0 : i32
    return %arg0, %c0_i32 : i32, i32
  }
  func.func @transform_2(%arg0: i32) -> (i32, i32) {
    %c0_i32 = arith.constant 0 : i32
    %c0_i32_0 = arith.constant 0 : i32
    %c0_i32_1 = arith.constant 0 : i32
    return %c0_i32, %c0_i32_0 : i32, i32
  }
  func.func @transform_3(%arg0: i32) -> (i32, i32) {
    %c0_i32 = arith.constant 0 : i32
    %c0_i32_0 = arith.constant 0 : i32
    %c0_i32_1 = arith.constant 0 : i32
    return %c0_i32, %c0_i32_0 : i32, i32
  }
  func.func @transform_4(%arg0: i32) -> (i32, i32) {
    %c0_i32 = arith.constant 0 : i32
    %c0_i32_0 = arith.constant 0 : i32
    %c0_i32_1 = arith.constant 0 : i32
    return %c0_i32, %c0_i32_0 : i32, i32
  }
  func.func @transform_5(%arg0: i32) -> (i32, i32) {
    %c0_i32 = arith.constant 0 : i32
    %c0_i32_0 = arith.constant 0 : i32
    return %arg0, %c0_i32 : i32, i32
  }
}

</mosaic_0001>

<llo_original>
// kernel: tpu_custom_call.1
$region0: #{tpu_custom_call.1}
  #allocation0 [shape = 'u32[]', space=smem, size = 0x4, offset = 0x4, fixed_abs, tag = 'smem constant byte address 0x4 - core index']
  #allocation1 [shape = 'u32[72,128]{1,0:T(1,128)}', space=vmem, size = 0x9000, scoped, tag = 'internal scratch']
  %s0 = inlined_call_operand.hbm [shape: f32[8,24], index: 0, kind: input, shape index: {}]
  %s1 = inlined_call_operand.hbm [shape: f32[8,8], index: 1, kind: input, shape index: {}]
  %s2 = inlined_call_operand.hbm [shape: f32[4,24], index: 2, kind: input, shape index: {}]
  %s3 = inlined_call_operand.hbm [shape: f32[4,8], index: 3, kind: input, shape index: {}]
  %s4 = inlined_call_operand.vmem [shape: f32[1,4], index: 4, kind: input, shape index: {}]
  %s5 = inlined_call_operand.hbm [shape: f32[8,8], index: 5, kind: output, shape index: {}]
  %s6 = sld [smem:[#allocation0]]
  $region46: #{tpu_custom_call.1} parent=0
    _
  %s8 = ssub.s32 1, %s6
  %s9 = scalar_select 0, %s8, %s6
  $region1: #{tpu_custom_call.1} parent=0
    #allocation2 [shape = 'u8[4096]{0}', space=vmem, size = 0x1000, scoped, tag = 'input window, operand 0, single buffered']
    #allocation3 [shape = 's32[1]{0}', space=sflag, size = 0x4, scoped, tag = 'scoped memory for tpu_custom_call.1']
    #allocation4 [shape = 's32[1]{0}', space=sflag, size = 0x4, scoped, tag = 'scoped memory for tpu_custom_call.1']
    #allocation5 [shape = 'u8[4096]{0}', space=vmem, size = 0x1000, scoped, tag = 'input window, operand 1, single buffered']
    #allocation6 [shape = 's32[1]{0}', space=sflag, size = 0x4, scoped, tag = 'scoped memory for tpu_custom_call.1']
    #allocation7 [shape = 'u8[2048]{0}', space=vmem, size = 0x800, scoped, tag = 'input window, operand 2, single buffered']
    #allocation8 [shape = 'u8[2048]{0}', space=vmem, size = 0x800, scoped, tag = 'input window, operand 3, single buffered']
    #allocation9 [shape = 's32[1]{0}', space=sflag, size = 0x4, scoped, tag = 'scoped memory for tpu_custom_call.1']
    #allocation10 [shape = 'u8[4096]{0}', space=vmem, size = 0x1000, scoped, tag = 'output window, operand 0, single buffered']
    %10 = vsyncpa [#allocation3], 0
    %11 = vsyncpa [#allocation6], 0
    %12 = vsyncpa [#allocation9], 0
    %13 = vsyncpa [#allocation4], 0
    // Predicated region
    $region2: #{tpu_custom_call.1} parent=1 // pred_check
      _
    $region3: #{tpu_custom_call.1} parent=1 // pred_check_branch
      %15 = sbr.rel (0) target = $region5
    $region4: #{tpu_custom_call.1} parent=1 // pred_region
      %17 = vsyncadd [#allocation3], 0
      %s19 = sshll.u32 %s0, 4
      %s20 = int_to_ptr.hbm [resolvable:$true] %s19
      %s21 = sshll.u32 [#allocation2], 4
      %s22 = int_to_ptr.vmem [resolvable:$true] %s21
      %24 = dma.hbm_to_vmem [thread:$0]  %s20, 128, %s22, [#allocation3]
    $region5: #{tpu_custom_call.1} parent=1 // pred_fallthru
      _
    // Predicated region
    $region6: #{tpu_custom_call.1} parent=1 // pred_check
      _
    $region7: #{tpu_custom_call.1} parent=1 // pred_check_branch
      %26 = sbr.rel (0) target = $region9
    $region8: #{tpu_custom_call.1} parent=1 // pred_region
      %28 = vsyncadd [#allocation6], 0
      %s30 = sshll.u32 %s1, 4
      %s31 = int_to_ptr.hbm [resolvable:$true] %s30
      %s32 = sshll.u32 [#allocation5], 4
      %s33 = int_to_ptr.vmem [resolvable:$true] %s32
      %35 = dma.hbm_to_vmem [thread:$0]  %s31, 128, %s33, [#allocation6]
    $region9: #{tpu_custom_call.1} parent=1 // pred_fallthru
      _
    // Predicated region
    $region10: #{tpu_custom_call.1} parent=1 // pred_check
      _
    $region11: #{tpu_custom_call.1} parent=1 // pred_check_branch
      %37 = sbr.rel (0) target = $region13
    $region12: #{tpu_custom_call.1} parent=1 // pred_region
      %39 = vsyncadd [#allocation6], 0
      %s41 = sshll.u32 %s2, 4
      %s42 = int_to_ptr.hbm [resolvable:$true] %s41
      %s43 = sshll.u32 [#allocation7], 4
      %s44 = int_to_ptr.vmem [resolvable:$true] %s43
      %46 = dma.hbm_to_vmem [thread:$0]  %s42, 64, %s44, [#allocation6]
    $region13: #{tpu_custom_call.1} parent=1 // pred_fallthru
      _
    // Predicated region
    $region14: #{tpu_custom_call.1} parent=1 // pred_check
      _
    $region15: #{tpu_custom_call.1} parent=1 // pred_check_branch
      %48 = sbr.rel (0) target = $region17
    $region16: #{tpu_custom_call.1} parent=1 // pred_region
      %50 = vsyncadd [#allocation9], 0
      %s52 = sshll.u32 %s3, 4
      %s53 = int_to_ptr.hbm [resolvable:$true] %s52
      %s54 = sshll.u32 [#allocation8], 4
      %s55 = int_to_ptr.vmem [resolvable:$true] %s54
      %57 = dma.hbm_to_vmem [thread:$0]  %s53, 64, %s55, [#allocation9]
    $region17: #{tpu_custom_call.1} parent=1 // pred_fallthru
      _
    // Predicated region
    $region18: #{tpu_custom_call.1} parent=1 // pred_check
      _
    $region19: #{tpu_custom_call.1} parent=1 // pred_check_branch
      %59 = sbr.rel (0) target = $region21
    $region20: #{tpu_custom_call.1} parent=1 // pred_region
      _
    $region21: #{tpu_custom_call.1} parent=1 // pred_fallthru
      _
    // Predicated region
    $region22: #{tpu_custom_call.1} parent=1 // pred_check
      _
    $region23: #{tpu_custom_call.1} parent=1 // pred_check_branch
      %61 = sbr.rel (0) target = $region25
    $region24: #{tpu_custom_call.1} parent=1 // pred_region
      %63 = dma.done [#allocation3], 128
    $region25: #{tpu_custom_call.1} parent=1 // pred_fallthru
      _
    // Predicated region
    $region26: #{tpu_custom_call.1} parent=1 // pred_check
      _
    $region27: #{tpu_custom_call.1} parent=1 // pred_check_branch
      %65 = sbr.rel (0) target = $region29
    $region28: #{tpu_custom_call.1} parent=1 // pred_region
      %67 = dma.done [#allocation6], 128
    $region29: #{tpu_custom_call.1} parent=1 // pred_fallthru
      _
    // Predicated region
    $region30: #{tpu_custom_call.1} parent=1 // pred_check
      _
    $region31: #{tpu_custom_call.1} parent=1 // pred_check_branch
      %69 = sbr.rel (0) target = $region33
    $region32: #{tpu_custom_call.1} parent=1 // pred_region
      %71 = dma.done [#allocation6], 64
    $region33: #{tpu_custom_call.1} parent=1 // pred_fallthru
      _
    // Predicated region
    $region34: #{tpu_custom_call.1} parent=1 // pred_check
      _
    $region35: #{tpu_custom_call.1} parent=1 // pred_check_branch
      %73 = sbr.rel (0) target = $region37
    $region36: #{tpu_custom_call.1} parent=1 // pred_region
      %75 = dma.done [#allocation9], 64
    $region37: #{tpu_custom_call.1} parent=1 // pred_fallthru
      _
    %v76 = vld [vmem:[#allocation2] sm:$0xff]
    %v77 = vld [vmem:[#allocation5] sm:$0xff]
    %v78 = vld [vmem:[#allocation7] sm:$0xf]
    %v79 = vld [vmem:[#allocation8] sm:$0xf]
    %vm80 = vcmask 64512
    %v82 = vsel %vm80, %v77, 0
    %v85 = vsel %vm80, %v79, 0
    %87 = vmatpush.xpose.msra.mxu0 0.0
    %88 = vmatpush.xpose.msra.mxu0 0.0
    %89 = vmatpush.xpose.msra.mxu0 0.0
    %90 = vmatpush.xpose.msra.mxu0 0.0
    %91 = vmatpush.xpose.msra.mxu0 0.0
    %92 = vmatpush.xpose.msra.mxu0 0.0
    %93 = vmatpush.xpose.msra.mxu0 0.0
    %94 = vmatpush.xpose.msra.mxu0 0.0
    %95 = vmatpush.xpose.msra.mxu0 0.0
    %96 = vmatpush.xpose.msra.mxu0 0.0
    %97 = vmatpush.xpose.msra.mxu0 0.0
    %98 = vmatpush.xpose.msra.mxu0 0.0
    %99 = vmatpush.xpose.msra.mxu0 0.0
    %100 = vmatpush.xpose.msra.mxu0 0.0
    %101 = vmatpush.xpose.msra.mxu0 0.0
    %102 = vmatpush.xpose.msra.mxu0 %v85
    %103 = vmatmul.f32.gmra.mxu0 %v82
    %v104 = vpop.f32.mrf.mxu0
    %v105 = vadd.f32 0.0, %v104
    %106 = vdwg.mxu0
    %vm107 = vcmask 195584
    %v109 = vsel %vm107, %v76, 0
    %v112 = vsel %vm107, %v78, 0
    %114 = vmatpush.xpose.msra.mxu0 0.0
    %115 = vmatpush.xpose.msra.mxu0 0.0
    %116 = vmatpush.xpose.msra.mxu0 0.0
    %117 = vmatpush.xpose.msra.mxu0 0.0
    %118 = vmatpush.xpose.msra.mxu0 0.0
    %119 = vmatpush.xpose.msra.mxu0 0.0
    %120 = vmatpush.xpose.msra.mxu0 0.0
    %121 = vmatpush.xpose.msra.mxu0 0.0
    %122 = vmatpush.xpose.msra.mxu0 0.0
    %123 = vmatpush.xpose.msra.mxu0 0.0
    %124 = vmatpush.xpose.msra.mxu0 0.0
    %125 = vmatpush.xpose.msra.mxu0 0.0
    %126 = vmatpush.xpose.msra.mxu0 0.0
    %127 = vmatpush.xpose.msra.mxu0 0.0
    %128 = vmatpush.xpose.msra.mxu0 0.0
    %129 = vmatpush.xpose.msra.mxu0 %v112
    %130 = vmatmul.f32.gmra.mxu0 %v109
    %v131 = vpop.f32.mrf.mxu0
    %v132 = vadd.f32 %v105, %v131
    %133 = vdwg.mxu0
    %v134 = vld [vmem:[%s4] sm:$0x1]
    %v136 = vperm.slane %v134, 0
    %v138 = vadd.f32 %v132, %v136
    %v139 = vsub.f32 0.0, %v138
    %v140 = vmul.f32 %v139, 1.442695
    %v141 = vpow.pop %v140
    %v142 = vadd.f32 %v141, 1.0
    %v143 = vrcp.pop %v142
    %v144 = vmul.f32 %v142, %v143
    %v145 = vsub.f32 1.0, %v144
    %v146 = vmul.f32 %v143, %v145
    %v147 = vadd.f32 %v143, %v146
    %vm148 = vweird.f32 %v142
    %vm149 = vweird.f32 %v143
    %vm150 = vmor %vm148, %vm149
    %v151 = vsel %vm150, %v143, %v147
    %v152 = vand.u32 2147483647, %v142
    %vm153 = vcmp.eq.f32.partialorder %v152, 8.507059e+37
    %v154 = vand.u32 %v142, 2147483648
    %v155 = vor.u32 1.1754944e-38, %v154
    %v156 = vsel %vm153, %v155, %v151
    %v157 = vmul.f32 1.0, %v156
    %159 = vrot.lane.b32.xlu0 %v157, 4
    %v160 = vpop.permute.xlu0 %159
    %vm162 = vcmask 31744
    %v163 = vsel %vm162, %v138, %v160
    %164 = vst.msk [vmem:[#allocation10] sm:$0xff] %vm80, %v163
    // Predicated region
    $region38: #{tpu_custom_call.1} parent=1 // pred_check
      _
    $region39: #{tpu_custom_call.1} parent=1 // pred_check_branch
      %166 = sbr.rel (0) target = $region41
    $region40: #{tpu_custom_call.1} parent=1 // pred_region
      %168 = vsyncadd [#allocation4], 0
      %s170 = sshll.u32 [#allocation10], 4
      %s171 = int_to_ptr.vmem [resolvable:$true] %s170
      %s172 = sshll.u32 %s5, 4
      %s173 = int_to_ptr.hbm [resolvable:$true] %s172
      %175 = dma.vmem_to_hbm [thread:$0]  %s171, 128, %s173, [#allocation4]
    $region41: #{tpu_custom_call.1} parent=1 // pred_fallthru
      _
    // Predicated region
    $region42: #{tpu_custom_call.1} parent=1 // pred_check
      _
    $region43: #{tpu_custom_call.1} parent=1 // pred_check_branch
      %177 = sbr.rel (0) target = $region45
    $region44: #{tpu_custom_call.1} parent=1 // pred_region
      %179 = dma.done [#allocation4], 128
    $region45: #{tpu_custom_call.1} parent=1 // pred_fallthru
      _
    %180 = vsyncpa [#allocation3], 1
    %181 = vsyncpa [#allocation6], 1
    %182 = vsyncpa [#allocation9], 1
    %183 = vsyncpa [#allocation4], 1

</llo_original>
